<compile_context>
chip_gen: v7x
topology: tpu7x:2x2x1
jax: 0.10.0
libtpu: 0.0.40
codegen_flags: <defaults>
</compile_context>

<pallas_src>
import math
import jax
import jax.numpy as jnp
from jax import lax
from jax.experimental import pallas as pl
from jax.experimental.pallas import tpu as pltpu

# Small synthetic hyper-parameters consistent with the module's forward.
S = 8        # sequence length
B = 2        # batch
D = 32       # d_model
H = 4        # attention heads
DH = D // H  # head dim
DFF = 64     # feed-forward hidden dim
R = S * B    # flattened rows, ordered (s, b)
HR = H * R   # head-stacked rows, ordered (h, (s, b))

# ---- packed-parameter slab layout (f32, 128 lanes wide, 8-aligned rows) ----
LANES = 128
ROW_WQKV = 0                  # (D, 3D)   [Wq/sqrt(DH) | Wk | Wv]
ROW_BQKV = ROW_WQKV + D       # 32: (1, 3D)
ROW_WO   = ROW_BQKV + 8       # 40: (D, D)    alpha-folded
ROW_BO   = ROW_WO + D         # 72: (1, D)    alpha-folded
ROW_W1   = ROW_BO + 8         # 80: (D, DFF)
ROW_B1   = ROW_W1 + D         # 112: (1, DFF)
ROW_W2   = ROW_B1 + 8         # 120: (DFF, D) alpha-folded
ROW_B2   = ROW_W2 + DFF       # 184: (1, D)   alpha-folded
SLAB_ROWS = ROW_B2 + 8        # 192


def _rezero_kernel(x_ref, mbias_ref, w_ref, out_ref):
    """Single invocation; x + mask-bias + one parameter slab resident in VMEM."""
    x = x_ref[...]                                                  # (R, D)

    # ---- static views into the packed parameter slab (zero-cost slices) ----
    wqkv = w_ref[pl.ds(ROW_WQKV, D),   pl.ds(0, 3 * D)]             # (D, 3D)
    bqkv = w_ref[pl.ds(ROW_BQKV, 1),   pl.ds(0, 3 * D)]             # (1, 3D)
    wo_a = w_ref[pl.ds(ROW_WO, D),     pl.ds(0, D)]                 # (D, D)   alpha*Wo
    bo_a = w_ref[pl.ds(ROW_BO, 1),     pl.ds(0, D)]                 # (1, D)   alpha*bo
    w1   = w_ref[pl.ds(ROW_W1, D),     pl.ds(0, DFF)]               # (D, DFF)
    b1   = w_ref[pl.ds(ROW_B1, 1),     pl.ds(0, DFF)]               # (1, DFF)
    w2_a = w_ref[pl.ds(ROW_W2, DFF),   pl.ds(0, D)]                 # (DFF, D) alpha*W2
    b2_a = w_ref[pl.ds(ROW_B2, 1),     pl.ds(0, D)]                 # (1, D)   alpha*b2

    # ---- fused QKV projection (1/sqrt(DH) baked into the q columns) --------
    qkv = jnp.dot(x, wqkv, preferred_element_type=jnp.float32) + bqkv   # (R, 3D)

    # ---- stack heads along sublanes: rows ordered (h, (s,b)) ---------------
    q_s = jnp.concatenate([qkv[:, h * DH:(h + 1) * DH] for h in range(H)], axis=0)
    k_s = jnp.concatenate([qkv[:, D + h * DH:D + (h + 1) * DH] for h in range(H)], axis=0)
    v_s = jnp.concatenate([qkv[:, 2 * D + h * DH:2 * D + (h + 1) * DH] for h in range(H)], axis=0)
    # each: (HR, DH)

    # ---- ONE merged scores / masked softmax / PV for all heads & batches ---
    s = lax.dot_general(q_s, k_s, (((1,), (1,)), ((), ())),
                        preferred_element_type=jnp.float32)         # (HR, HR)
    s = s + mbias_ref[...]                                          # 0 / -1e9 additive mask
    s = s - jnp.max(s, axis=-1, keepdims=True)
    p = jnp.exp(s)
    rowsum = jnp.sum(p, axis=-1, keepdims=True)                     # (HR, 1)
    o_s = jnp.dot(p, v_s, preferred_element_type=jnp.float32)       # (HR, DH)
    # Normalize after PV (DH lanes instead of HR); reciprocal on the EUP slot.
    o_s = o_s * pl.reciprocal(rowsum, approx=True)

    # ---- back to (R, D) lane layout, single Wo projection -------------------
    attn_cat = jnp.concatenate([o_s[h * R:(h + 1) * R, :] for h in range(H)],
                               axis=1)                               # (R, D)
    attn = jnp.dot(attn_cat, wo_a, preferred_element_type=jnp.float32) + bo_a

    # ---- ReZero residual #1 (alpha already folded into wo/bo) ---------------
    x1 = x + attn

    # ---- feed-forward: Linear -> ReLU -> Linear (alpha folded into W2/b2) ---
    h1 = jnp.maximum(
        jnp.dot(x1, w1, preferred_element_type=jnp.float32) + b1, 0.0)
    ff = jnp.dot(h1, w2_a, preferred_element_type=jnp.float32) + b2_a

    # ---- ReZero residual #2 --------------------------------------------------
    out_ref[...] = (x1 + ff).astype(out_ref.dtype)


def rezero_forward(sequence, mask, packed):
    """sequence: [S, B, D], mask: [B, S, S] (>0 = keep) -> [S, B, D]."""
    # Layout-preserving flatten: [S, B, D] -> [S*B, D]; rows ordered (s, b).
    x2 = sequence.reshape(R, D)

    # Additive mask bias, block-diagonal over (head, batch); rows/cols ordered
    # (h, (s, b)) to match the in-kernel head stacking. Tiny (HR*HR = 4096 f32);
    # fuses into a couple of wrapper-side XLA ops (precomputable for static masks).
    m = mask.astype(jnp.float32)
    eye_b = jnp.eye(B, dtype=jnp.float32)
    cm = (jnp.transpose(m, (1, 0, 2))[:, :, :, None]
          * eye_b[None, :, None, :]).reshape(R, R)                   # (R, R), (b==b2)*mask
    eye_h = jnp.eye(H, dtype=jnp.float32)
    cbig = (eye_h[:, None, :, None] * cm[None, :, None, :]).reshape(HR, HR)
    mbias = jnp.where(cbig > 0, 0.0, -1e9).astype(jnp.float32)

    vmem = pl.BlockSpec(memory_space=pltpu.MemorySpace.VMEM)
    out = pl.pallas_call(
        _rezero_kernel,
        out_shape=jax.ShapeDtypeStruct((R, D), jnp.float32),
        in_specs=[vmem, vmem, vmem],     # x, mask bias, parameter slab
        out_specs=vmem,
    )(x2, mbias, packed["wslab"])

    # Layout-preserving unflatten back to [S, B, D].
    return out.reshape(S, B, D)


def pack_params(p):
    """One-time packing: fuse Wq|Wk|Wv, bake in 1/sqrt(DH), fold alpha into
    Wo/bo/W2/b2 (inference-style frozen-parameter boundary), and lay everything
    out in a single (SLAB_ROWS, 128) f32 VMEM slab -> one entry DMA."""
    scale = 1.0 / math.sqrt(DH)
    alpha = p["alpha"][0]
    wqkv = jnp.concatenate([p["wq"] * scale, p["wk"], p["wv"]], axis=1)   # (D, 3D)
    bqkv = jnp.concatenate([p["bq"] * scale, p["bk"], p["bv"]], axis=1)   # (1, 3D)

    slab = jnp.zeros((SLAB_ROWS, LANES), jnp.float32)
    slab = slab.at[ROW_WQKV:ROW_WQKV + D, 0:3 * D].set(wqkv)
    slab = slab.at[ROW_BQKV:ROW_BQKV + 1, 0:3 * D].set(bqkv)
    slab = slab.at[ROW_WO:ROW_WO + D, 0:D].set(alpha * p["wo"])
    slab = slab.at[ROW_BO:ROW_BO + 1, 0:D].set(alpha * p["bo"])
    slab = slab.at[ROW_W1:ROW_W1 + D, 0:DFF].set(p["w1"])
    slab = slab.at[ROW_B1:ROW_B1 + 1, 0:DFF].set(p["b1"])
    slab = slab.at[ROW_W2:ROW_W2 + DFF, 0:D].set(alpha * p["w2"])
    slab = slab.at[ROW_B2:ROW_B2 + 1, 0:D].set(alpha * p["b2"])
    return {"wslab": slab}


def rezero_reference(sequence, mask, params):
    """Pure-JAX reference for correctness checking (uses unpacked params)."""
    x = jnp.transpose(sequence, (1, 0, 2))                       # [B, S, D]
    alpha = params["alpha"][0]

    q = jnp.einsum("bsd,de->bse", x, params["wq"]) + params["bq"]
    k = jnp.einsum("bsd,de->bse", x, params["wk"]) + params["bk"]
    v = jnp.einsum("bsd,de->bse", x, params["wv"]) + params["bv"]

    def split(t):
        return jnp.transpose(t.reshape(B, S, H, DH), (0, 2, 1, 3))  # [B,H,S,DH]

    qh, kh, vh = split(q), split(k), split(v)
    s = jnp.einsum("bhqd,bhkd->bhqk", qh, kh) / math.sqrt(DH)
    s = jnp.where(mask[:, None] > 0, s, -1e9)
    p = jax.nn.softmax(s, axis=-1)
    attn = jnp.einsum("bhqk,bhkd->bhqd", p, vh)
    attn = jnp.transpose(attn, (0, 2, 1, 3)).reshape(B, S, D)
    attn = jnp.einsum("bsd,de->bse", attn, params["wo"]) + params["bo"]

    x1 = x + alpha * attn
    h1 = jax.nn.relu(jnp.einsum("bsd,df->bsf", x1, params["w1"]) + params["b1"])
    ff = jnp.einsum("bsf,fd->bsd", h1, params["w2"]) + params["b2"]
    out = x1 + alpha * ff
    return jnp.transpose(out, (1, 0, 2))


def init_params(key):
    ks = jax.random.split(key, 8)
    scale = 0.05
    return {
        "wq": scale * jax.random.normal(ks[0], (D, D), jnp.float32),
        "bq": jnp.zeros((1, D), jnp.float32),
        "wk": scale * jax.random.normal(ks[1], (D, D), jnp.float32),
        "bk": jnp.zeros((1, D), jnp.float32),
        "wv": scale * jax.random.normal(ks[2], (D, D), jnp.float32),
        "bv": jnp.zeros((1, D), jnp.float32),
        "wo": scale * jax.random.normal(ks[3], (D, D), jnp.float32),
        "bo": jnp.zeros((1, D), jnp.float32),
        "w1": scale * jax.random.normal(ks[4], (D, DFF), jnp.float32),
        "b1": 0.01 * jnp.ones((1, DFF), jnp.float32),
        "w2": scale * jax.random.normal(ks[5], (DFF, D), jnp.float32),
        "b2": 0.01 * jnp.ones((1, D), jnp.float32),
        # PyTorch __init__ uses torch.zeros(1); use a nonzero deterministic
        # value so the attention/FFN compute path is actually exercised.
        "alpha": jnp.full((1,), 0.1, jnp.float32),
    }


if __name__ == "__main__":
    key = jax.random.PRNGKey(0)
    kseq, kparam = jax.random.split(key)

    sequence = jax.random.normal(kseq, (S, B, D), jnp.float32)   # [S, B, D]
    # Deterministic causal mask, broadcast over batch: 1 = may attend.
    mask = jnp.tile(jnp.tril(jnp.ones((S, S), jnp.float32))[None], (B, 1, 1))

    params = init_params(kparam)
    packed = pack_params(params)

    fwd = jax.jit(rezero_forward)
    out = jax.block_until_ready(fwd(sequence, mask, packed))

    ref = rezero_reference(sequence, mask, params)
    assert out.shape == (S, B, D)
    assert jnp.allclose(out, ref, rtol=1e-4, atol=1e-4), (
        f"max err {jnp.max(jnp.abs(out - ref))}")

    print("KERNEL_OK")
</pallas_src>

<mosaic_0001>
module attributes {stable_mosaic.version = 11 : i64} {
  func.func @_rezero_kernel(%arg0: memref<16x32xf32, #tpu.memory_space<vmem>>, %arg1: memref<64x64xf32, #tpu.memory_space<vmem>>, %arg2: memref<192x128xf32, #tpu.memory_space<vmem>>, %arg3: memref<16x32xf32, #tpu.memory_space<vmem>>) attributes {dimension_semantics = [], scalar_prefetch = 0 : i64, scratch_operands = 0 : i64, tpu.core_type = #tpu.core_type<tc>} {
    %c0 = arith.constant 0 : index
    %c0_0 = arith.constant 0 : index
    %0 = vector.load %arg0[%c0, %c0_0] : memref<16x32xf32, #tpu.memory_space<vmem>>, vector<16x32xf32>
    %c0_1 = arith.constant 0 : index
    %c0_2 = arith.constant 0 : index
    %1 = vector.load %arg2[%c0_1, %c0_2] : memref<192x128xf32, #tpu.memory_space<vmem>>, vector<32x96xf32>
    %c32 = arith.constant 32 : index
    %c0_3 = arith.constant 0 : index
    %2 = vector.load %arg2[%c32, %c0_3] : memref<192x128xf32, #tpu.memory_space<vmem>>, vector<1x96xf32>
    %c40 = arith.constant 40 : index
    %c0_4 = arith.constant 0 : index
    %3 = vector.load %arg2[%c40, %c0_4] : memref<192x128xf32, #tpu.memory_space<vmem>>, vector<32x32xf32>
    %c72 = arith.constant 72 : index
    %c0_5 = arith.constant 0 : index
    %4 = vector.load %arg2[%c72, %c0_5] : memref<192x128xf32, #tpu.memory_space<vmem>>, vector<1x32xf32>
    %c80 = arith.constant 80 : index
    %c0_6 = arith.constant 0 : index
    %5 = vector.load %arg2[%c80, %c0_6] : memref<192x128xf32, #tpu.memory_space<vmem>>, vector<32x64xf32>
    %c112 = arith.constant 112 : index
    %c0_7 = arith.constant 0 : index
    %6 = vector.load %arg2[%c112, %c0_7] : memref<192x128xf32, #tpu.memory_space<vmem>>, vector<1x64xf32>
    %c120 = arith.constant 120 : index
    %c0_8 = arith.constant 0 : index
    %7 = vector.load %arg2[%c120, %c0_8] : memref<192x128xf32, #tpu.memory_space<vmem>>, vector<64x32xf32>
    %c184 = arith.constant 184 : index
    %c0_9 = arith.constant 0 : index
    %8 = vector.load %arg2[%c184, %c0_9] : memref<192x128xf32, #tpu.memory_space<vmem>>, vector<1x32xf32>
    %cst = arith.constant dense<0.000000e+00> : vector<16x96xf32>
    %9 = tpu.matmul %0, %1, %cst {dimension_numbers = #tpu.dot_dimension_numbers<[1], [0], [0], [1], [0, 0, 1, 1], [], []>} : vector<16x32xf32>, vector<32x96xf32>, vector<16x96xf32> -> vector<16x96xf32>
    %10 = vector.broadcast %2 : vector<1x96xf32> to vector<16x96xf32>
    %11 = arith.addf %9, %10 : vector<16x96xf32>
    %12 = vector.extract_strided_slice %11 {offsets = [0, 0], sizes = [16, 8], strides = [1, 1]} : vector<16x96xf32> to vector<16x8xf32>
    %13 = vector.extract_strided_slice %11 {offsets = [0, 8], sizes = [16, 8], strides = [1, 1]} : vector<16x96xf32> to vector<16x8xf32>
    %14 = vector.extract_strided_slice %11 {offsets = [0, 16], sizes = [16, 8], strides = [1, 1]} : vector<16x96xf32> to vector<16x8xf32>
    %15 = vector.extract_strided_slice %11 {offsets = [0, 24], sizes = [16, 8], strides = [1, 1]} : vector<16x96xf32> to vector<16x8xf32>
    %16 = tpu.concatenate %12, %13, %14, %15 in 0 : vector<16x8xf32>, vector<16x8xf32>, vector<16x8xf32>, vector<16x8xf32> -> vector<64x8xf32>
    %17 = vector.extract_strided_slice %11 {offsets = [0, 32], sizes = [16, 8], strides = [1, 1]} : vector<16x96xf32> to vector<16x8xf32>
    %18 = vector.extract_strided_slice %11 {offsets = [0, 40], sizes = [16, 8], strides = [1, 1]} : vector<16x96xf32> to vector<16x8xf32>
    %19 = vector.extract_strided_slice %11 {offsets = [0, 48], sizes = [16, 8], strides = [1, 1]} : vector<16x96xf32> to vector<16x8xf32>
    %20 = vector.extract_strided_slice %11 {offsets = [0, 56], sizes = [16, 8], strides = [1, 1]} : vector<16x96xf32> to vector<16x8xf32>
    %21 = tpu.concatenate %17, %18, %19, %20 in 0 : vector<16x8xf32>, vector<16x8xf32>, vector<16x8xf32>, vector<16x8xf32> -> vector<64x8xf32>
    %22 = vector.extract_strided_slice %11 {offsets = [0, 64], sizes = [16, 8], strides = [1, 1]} : vector<16x96xf32> to vector<16x8xf32>
    %23 = vector.extract_strided_slice %11 {offsets = [0, 72], sizes = [16, 8], strides = [1, 1]} : vector<16x96xf32> to vector<16x8xf32>
    %24 = vector.extract_strided_slice %11 {offsets = [0, 80], sizes = [16, 8], strides = [1, 1]} : vector<16x96xf32> to vector<16x8xf32>
    %25 = vector.extract_strided_slice %11 {offsets = [0, 88], sizes = [16, 8], strides = [1, 1]} : vector<16x96xf32> to vector<16x8xf32>
    %26 = tpu.concatenate %22, %23, %24, %25 in 0 : vector<16x8xf32>, vector<16x8xf32>, vector<16x8xf32>, vector<16x8xf32> -> vector<64x8xf32>
    %cst_10 = arith.constant dense<0.000000e+00> : vector<64x64xf32>
    %27 = tpu.matmul %16, %21, %cst_10 {dimension_numbers = #tpu.dot_dimension_numbers<[1], [1], [0], [0], [0, 0, 1, 0], [], []>} : vector<64x8xf32>, vector<64x8xf32>, vector<64x64xf32> -> vector<64x64xf32>
    %c0_11 = arith.constant 0 : index
    %c0_12 = arith.constant 0 : index
    %28 = vector.load %arg1[%c0_11, %c0_12] : memref<64x64xf32, #tpu.memory_space<vmem>>, vector<64x64xf32>
    %29 = arith.addf %27, %28 : vector<64x64xf32>
    %cst_13 = arith.constant dense<0xFF800000> : vector<64xf32>
    %30 = vector.multi_reduction <maximumf>, %29, %cst_13 [1] : vector<64x64xf32> to vector<64xf32>
    %31 = vector.shape_cast %30 : vector<64xf32> to vector<64x1xf32>
    %32 = vector.broadcast %31 : vector<64x1xf32> to vector<64x64xf32>
    %33 = arith.subf %29, %32 : vector<64x64xf32>
    %34 = math.exp %33 : vector<64x64xf32>
    %cst_14 = arith.constant dense<0.000000e+00> : vector<64xf32>
    %35 = vector.multi_reduction <add>, %34, %cst_14 [1] : vector<64x64xf32> to vector<64xf32>
    %36 = vector.shape_cast %35 : vector<64xf32> to vector<64x1xf32>
    %cst_15 = arith.constant dense<0.000000e+00> : vector<64x8xf32>
    %37 = tpu.matmul %34, %26, %cst_15 {dimension_numbers = #tpu.dot_dimension_numbers<[1], [0], [0], [1], [0, 0, 1, 1], [], []>} : vector<64x64xf32>, vector<64x8xf32>, vector<64x8xf32> -> vector<64x8xf32>
    %38 = tpu.reciprocal %36 {approx = true} : vector<64x1xf32> -> vector<64x1xf32>
    %39 = vector.broadcast %38 : vector<64x1xf32> to vector<64x8xf32>
    %40 = arith.mulf %37, %39 : vector<64x8xf32>
    %41 = vector.extract_strided_slice %40 {offsets = [0, 0], sizes = [16, 8], strides = [1, 1]} : vector<64x8xf32> to vector<16x8xf32>
    %42 = vector.extract_strided_slice %40 {offsets = [16, 0], sizes = [16, 8], strides = [1, 1]} : vector<64x8xf32> to vector<16x8xf32>
    %43 = vector.extract_strided_slice %40 {offsets = [32, 0], sizes = [16, 8], strides = [1, 1]} : vector<64x8xf32> to vector<16x8xf32>
    %44 = vector.extract_strided_slice %40 {offsets = [48, 0], sizes = [16, 8], strides = [1, 1]} : vector<64x8xf32> to vector<16x8xf32>
    %45 = tpu.concatenate %41, %42, %43, %44 in 1 : vector<16x8xf32>, vector<16x8xf32>, vector<16x8xf32>, vector<16x8xf32> -> vector<16x32xf32>
    %cst_16 = arith.constant dense<0.000000e+00> : vector<16x32xf32>
    %46 = tpu.matmul %45, %3, %cst_16 {dimension_numbers = #tpu.dot_dimension_numbers<[1], [0], [0], [1], [0, 0, 1, 1], [], []>} : vector<16x32xf32>, vector<32x32xf32>, vector<16x32xf32> -> vector<16x32xf32>
    %47 = vector.broadcast %4 : vector<1x32xf32> to vector<16x32xf32>
    %48 = arith.addf %46, %47 : vector<16x32xf32>
    %49 = arith.addf %0, %48 : vector<16x32xf32>
    %cst_17 = arith.constant dense<0.000000e+00> : vector<16x64xf32>
    %50 = tpu.matmul %49, %5, %cst_17 {dimension_numbers = #tpu.dot_dimension_numbers<[1], [0], [0], [1], [0, 0, 1, 1], [], []>} : vector<16x32xf32>, vector<32x64xf32>, vector<16x64xf32> -> vector<16x64xf32>
    %51 = vector.broadcast %6 : vector<1x64xf32> to vector<16x64xf32>
    %52 = arith.addf %50, %51 : vector<16x64xf32>
    %cst_18 = arith.constant 0.000000e+00 : f32
    %53 = vector.broadcast %cst_18 : f32 to vector<16x64xf32>
    %54 = arith.maximumf %52, %53 : vector<16x64xf32>
    %cst_19 = arith.constant dense<0.000000e+00> : vector<16x32xf32>
    %55 = tpu.matmul %54, %7, %cst_19 {dimension_numbers = #tpu.dot_dimension_numbers<[1], [0], [0], [1], [0, 0, 1, 1], [], []>} : vector<16x64xf32>, vector<64x32xf32>, vector<16x32xf32> -> vector<16x32xf32>
    %56 = vector.broadcast %8 : vector<1x32xf32> to vector<16x32xf32>
    %57 = arith.addf %55, %56 : vector<16x32xf32>
    %58 = arith.addf %49, %57 : vector<16x32xf32>
    %c0_20 = arith.constant 0 : index
    %c0_21 = arith.constant 0 : index
    %59 = vector.load %arg3[%c0_20, %c0_21] : memref<16x32xf32, #tpu.memory_space<vmem>>, vector<16x32xf32>
    tpu.vector_store %arg3[%c0_20, %c0_21], %58 {strides = array<i32>} : memref<16x32xf32, #tpu.memory_space<vmem>>, vector<16x32xf32>,
    return
  }
}

</mosaic_0001>

<llo_original>
// kernel: rezero_forward.1
$region0: #{rezero_forward.1}
  #allocation0 [shape = 'u32[]', space=smem, size = 0x4, offset = 0x4, fixed_abs, tag = 'smem constant byte address 0x4 - core index']
  #allocation1 [shape = 'u32[144,128]{1,0:T(1,128)}', space=vmem, size = 0x12000, scoped, tag = 'internal scratch']
  %s0 = inlined_call_operand.vmem [shape: f32[16,32], index: 0, kind: input, shape index: {}]
  %s1 = inlined_call_operand.vmem [shape: f32[64,64], index: 1, kind: input, shape index: {}]
  %s2 = inlined_call_operand.vmem [shape: f32[192,128], index: 2, kind: input, shape index: {}]
  %s3 = inlined_call_operand.hbm [shape: f32[16,32], index: 3, kind: output, shape index: {}]
  %s4 = sld [smem:[#allocation0]]
  $region22: #{rezero_forward.1} parent=0
    _
  %s6 = ssub.s32 1, %s4
  %s7 = scalar_select 0, %s6, %s4
  $region1: #{rezero_forward.1} parent=0
    #allocation2 [shape = 'u8[8192]{0}', space=vmem, size = 0x2000, scoped, tag = 'output window, operand 0, single buffered']
    #allocation3 [shape = 's32[1]{0}', space=sflag, size = 0x4, scoped, tag = 'scoped memory for rezero_forward.1']
    %8 = vsyncpa [#allocation3], 0
    // Predicated region
    $region2: #{rezero_forward.1} parent=1 // pred_check
      _
    $region3: #{rezero_forward.1} parent=1 // pred_check_branch
      %10 = sbr.rel (0) target = $region5
    $region4: #{rezero_forward.1} parent=1 // pred_region
      _
    $region5: #{rezero_forward.1} parent=1 // pred_fallthru
      _
    // Predicated region
    $region6: #{rezero_forward.1} parent=1 // pred_check
      _
    $region7: #{rezero_forward.1} parent=1 // pred_check_branch
      %12 = sbr.rel (0) target = $region9
    $region8: #{rezero_forward.1} parent=1 // pred_region
      _
    $region9: #{rezero_forward.1} parent=1 // pred_fallthru
      _
    // Predicated region
    $region10: #{rezero_forward.1} parent=1 // pred_check
      _
    $region11: #{rezero_forward.1} parent=1 // pred_check_branch
      %14 = sbr.rel (0) target = $region13
    $region12: #{rezero_forward.1} parent=1 // pred_region
      _
    $region13: #{rezero_forward.1} parent=1 // pred_fallthru
      _
    %v15 = vld [vmem:[%s0] sm:$0xff]
    %v16 = vld [vmem:[%s0 + $0x8] sm:$0xff]
    %v17 = vld [vmem:[%s2] sm:$0xff]
    %v18 = vld [vmem:[%s2 + $0x8] sm:$0xff]
    %v19 = vld [vmem:[%s2 + $0x10] sm:$0xff]
    %v20 = vld [vmem:[%s2 + $0x18] sm:$0xff]
    %v21 = vld [vmem:[%s2 + $0x20] sm:$0x1]
    %v22 = vld [vmem:[%s2 + $0x28] sm:$0xff]
    %v23 = vld [vmem:[%s2 + $0x30] sm:$0xff]
    %v24 = vld [vmem:[%s2 + $0x38] sm:$0xff]
    %v25 = vld [vmem:[%s2 + $0x40] sm:$0xff]
    %v26 = vld [vmem:[%s2 + $0x48] sm:$0x1]
    %v27 = vld [vmem:[%s2 + $0x50] sm:$0xff]
    %v28 = vld [vmem:[%s2 + $0x58] sm:$0xff]
    %v29 = vld [vmem:[%s2 + $0x60] sm:$0xff]
    %v30 = vld [vmem:[%s2 + $0x68] sm:$0xff]
    %v31 = vld [vmem:[%s2 + $0x70] sm:$0x1]
    %v32 = vld [vmem:[%s2 + $0x78] sm:$0xff]
    %v33 = vld [vmem:[%s2 + $0x80] sm:$0xff]
    %v34 = vld [vmem:[%s2 + $0x88] sm:$0xff]
    %v35 = vld [vmem:[%s2 + $0x90] sm:$0xff]
    %v36 = vld [vmem:[%s2 + $0x98] sm:$0xff]
    %v37 = vld [vmem:[%s2 + $0xa0] sm:$0xff]
    %v38 = vld [vmem:[%s2 + $0xa8] sm:$0xff]
    %v39 = vld [vmem:[%s2 + $0xb0] sm:$0xff]
    %v40 = vld [vmem:[%s2 + $0xb8] sm:$0x1]
    %v41 = vlaneseq
    %v42 = vshrl.u32 %v41, 7
    %v43 = vsub.s32 0, %v42
    %v44 = vrot.slane %v21, %v43
    %vm45 = vcmask 261120
    %v47 = vsel %vm45, %v15, 0
    %v50 = vsel %vm45, %v16, 0
    %52 = vmatprep.subr.mxu0 0.0
    %53 = vmatpush1.msra.mxu0 %v17
    %54 = vmatprep.subr.mxu0 0.0
    %55 = vmatpush1.msra.mxu0 %v18
    %56 = vmatprep.subr.mxu0 0.0
    %57 = vmatpush1.msra.mxu0 %v19
    %58 = vmatprep.subr.mxu0 0.0
    %59 = vmatpush1.msra.mxu0 %v20
    %60 = vmatprep.subr.mxu0 0.0
    %61 = vmatpush1.msra.mxu0 0.0
    %62 = vmatprep.subr.mxu0 0.0
    %63 = vmatpush1.msra.mxu0 0.0
    %64 = vmatprep.subr.mxu0 0.0
    %65 = vmatpush1.msra.mxu0 0.0
    %66 = vmatprep.subr.mxu0 0.0
    %67 = vmatpush1.msra.mxu0 0.0
    %68 = vmatprep.subr.mxu0 0.0
    %69 = vmatpush1.msra.mxu0 0.0
    %70 = vmatprep.subr.mxu0 0.0
    %71 = vmatpush1.msra.mxu0 0.0
    %72 = vmatprep.subr.mxu0 0.0
    %73 = vmatpush1.msra.mxu0 0.0
    %74 = vmatprep.subr.mxu0 0.0
    %75 = vmatpush1.msra.mxu0 0.0
    %76 = vmatprep.subr.mxu0 0.0
    %77 = vmatpush1.msra.mxu0 0.0
    %78 = vmatprep.subr.mxu0 0.0
    %79 = vmatpush1.msra.mxu0 0.0
    %80 = vmatprep.subr.mxu0 0.0
    %81 = vmatpush1.msra.mxu0 0.0
    %82 = vmatprep.subr.mxu0 0.0
    %83 = vmatpush1.msra.mxu0 0.0
    %84 = vmatprep.subr.mxu0 0.0
    %85 = vmatpush1.msra.mxu0 0.0
    %86 = vmatprep.subr.mxu0 0.0
    %87 = vmatpush1.msra.mxu0 0.0
    %88 = vmatprep.subr.mxu0 0.0
    %89 = vmatpush1.msra.mxu0 0.0
    %90 = vmatprep.subr.mxu0 0.0
    %91 = vmatpush1.msra.mxu0 0.0
    %92 = vmatprep.subr.mxu0 0.0
    %93 = vmatpush1.msra.mxu0 0.0
    %94 = vmatprep.subr.mxu0 0.0
    %95 = vmatpush1.msra.mxu0 0.0
    %96 = vmatprep.subr.mxu0 0.0
    %97 = vmatpush1.msra.mxu0 0.0
    %98 = vmatprep.subr.mxu0 0.0
    %99 = vmatpush1.msra.mxu0 0.0
    %100 = vmatprep.subr.mxu0 0.0
    %101 = vmatpush1.msra.mxu0 0.0
    %102 = vmatprep.subr.mxu0 0.0
    %103 = vmatpush1.msra.mxu0 0.0
    %104 = vmatprep.subr.mxu0 0.0
    %105 = vmatpush1.msra.mxu0 0.0
    %106 = vmatprep.subr.mxu0 0.0
    %107 = vmatpush1.msra.mxu0 0.0
    %108 = vmatprep.subr.mxu0 0.0
    %109 = vmatpush1.msra.mxu0 0.0
    %110 = vmatprep.subr.mxu0 0.0
    %111 = vmatpush1.msra.mxu0 0.0
    %112 = vmatprep.subr.mxu0 0.0
    %113 = vmatpush1.msra.mxu0 0.0
    %114 = vmatprep.subr.mxu0 0.0
    %115 = vmatpush1.msra.mxu0 0.0
    %116 = vmatprep.mubr.f32.mxu0 0.0
    %117 = vmatmul.mubr.f32.gmra.mrb[0].mxu0 %v47
    %v118 = vpop.f32.mrb[0].mxu0
    %v119 = vadd.f32 %v44, %v118
    %v120 = vpop.f32.mrb[0].mxu0
    %121 = vmatprep.mubr.f32.mxu0 0.0
    %122 = vmatmul.mubr.f32.gmra.mrb[0].mxu0 %v50
    %v123 = vpop.f32.mrb[0].mxu0
    %v124 = vadd.f32 %v44, %v123
    %v125 = vpop.f32.mrb[0].mxu0
    %126 = vdwg.mxu0
    %129 = vrot.lane.b32.xlu0 %v119, 120
    %v130 = vpop.permute.xlu0 %129
    %131 = vrot.lane.b32.xlu0 %v124, 120
    %v132 = vpop.permute.xlu0 %131
    %133 = vrot.lane.b32.xlu0 %v119, 112
    %v134 = vpop.permute.xlu0 %133
    %135 = vrot.lane.b32.xlu0 %v124, 112
    %v136 = vpop.permute.xlu0 %135
    %137 = vrot.lane.b32.xlu0 %v119, 104
    %v138 = vpop.permute.xlu0 %137
    %139 = vrot.lane.b32.xlu0 %v124, 104
    %v140 = vpop.permute.xlu0 %139
    %v141 = vld [vmem:[%s1] sm:$0xff]
    %v142 = vld [vmem:[%s1 + $0x8] sm:$0xff]
    %v143 = vld [vmem:[%s1 + $0x10] sm:$0xff]
    %v144 = vld [vmem:[%s1 + $0x18] sm:$0xff]
    %v145 = vld [vmem:[%s1 + $0x20] sm:$0xff]
    %v146 = vld [vmem:[%s1 + $0x28] sm:$0xff]
    %v147 = vld [vmem:[%s1 + $0x30] sm:$0xff]
    %v148 = vld [vmem:[%s1 + $0x38] sm:$0xff]
    %149 = vrot.lane.b32.xlu0 %v119, 96
    %v150 = vpop.permute.xlu0 %149
    %151 = vrot.lane.b32.xlu0 %v124, 96
    %v152 = vpop.permute.xlu0 %151
    %153 = vrot.lane.b32.xlu0 %v130, 96
    %v154 = vpop.permute.xlu0 %153
    %155 = vrot.lane.b32.xlu0 %v132, 96
    %v156 = vpop.permute.xlu0 %155
    %157 = vrot.lane.b32.xlu0 %v134, 96
    %v158 = vpop.permute.xlu0 %157
    %159 = vrot.lane.b32.xlu0 %v136, 96
    %v160 = vpop.permute.xlu0 %159
    %161 = vrot.lane.b32.xlu0 %v138, 96
    %v162 = vpop.permute.xlu0 %161
    %163 = vrot.lane.b32.xlu0 %v140, 96
    %v164 = vpop.permute.xlu0 %163
    %vm165 = vcmask 64512
    %v166 = vsel %vm165, %v119, 0
    %v168 = vsel %vm165, %v124, 0
    %v170 = vsel %vm165, %v130, 0
    %v172 = vsel %vm165, %v132, 0
    %v174 = vsel %vm165, %v134, 0
    %v176 = vsel %vm165, %v136, 0
    %v178 = vsel %vm165, %v138, 0
    %v180 = vsel %vm165, %v140, 0
    %v182 = vsel %vm165, %v150, 0
    %v184 = vsel %vm165, %v152, 0
    %v186 = vsel %vm165, %v154, 0
    %v188 = vsel %vm165, %v156, 0
    %v190 = vsel %vm165, %v158, 0
    %v192 = vsel %vm165, %v160, 0
    %v194 = vsel %vm165, %v162, 0
    %v196 = vsel %vm165, %v164, 0
    %198 = vmatprep.subr.mxu0 0.0
    %199 = vmatpush1.xpose.msra.mxu0 %v182
    %200 = vmatprep.subr.mxu0 0.0
    %201 = vmatpush1.xpose.msra.mxu0 %v184
    %202 = vmatprep.subr.mxu0 0.0
    %203 = vmatpush1.xpose.msra.mxu0 %v186
    %204 = vmatprep.subr.mxu0 0.0
    %205 = vmatpush1.xpose.msra.mxu0 %v188
    %206 = vmatprep.subr.mxu0 0.0
    %207 = vmatpush1.xpose.msra.mxu0 %v190
    %208 = vmatprep.subr.mxu0 0.0
    %209 = vmatpush1.xpose.msra.mxu0 %v192
    %210 = vmatprep.subr.mxu0 0.0
    %211 = vmatpush1.xpose.msra.mxu0 %v194
    %212 = vmatprep.subr.mxu0 0.0
    %213 = vmatpush1.xpose.msra.mxu0 %v196
    %214 = vmatprep.subr.mxu0 0.0
    %215 = vmatpush1.xpose.msra.mxu0 0.0
    %216 = vmatprep.subr.mxu0 0.0
    %217 = vmatpush1.xpose.msra.mxu0 0.0
    %218 = vmatprep.subr.mxu0 0.0
    %219 = vmatpush1.xpose.msra.mxu0 0.0
    %220 = vmatprep.subr.mxu0 0.0
    %221 = vmatpush1.xpose.msra.mxu0 0.0
    %222 = vmatprep.subr.mxu0 0.0
    %223 = vmatpush1.xpose.msra.mxu0 0.0
    %224 = vmatprep.subr.mxu0 0.0
    %225 = vmatpush1.xpose.msra.mxu0 0.0
    %226 = vmatprep.subr.mxu0 0.0
    %227 = vmatpush1.xpose.msra.mxu0 0.0
    %228 = vmatprep.subr.mxu0 0.0
    %229 = vmatpush1.xpose.msra.mxu0 0.0
    %230 = vmatprep.subr.mxu0 0.0
    %231 = vmatpush1.xpose.msra.mxu0 0.0
    %232 = vmatprep.subr.mxu0 0.0
    %233 = vmatpush1.xpose.msra.mxu0 0.0
    %234 = vmatprep.subr.mxu0 0.0
    %235 = vmatpush1.xpose.msra.mxu0 0.0
    %236 = vmatprep.subr.mxu0 0.0
    %237 = vmatpush1.xpose.msra.mxu0 0.0
    %238 = vmatprep.subr.mxu0 0.0
    %239 = vmatpush1.xpose.msra.mxu0 0.0
    %240 = vmatprep.subr.mxu0 0.0
    %241 = vmatpush1.xpose.msra.mxu0 0.0
    %242 = vmatprep.subr.mxu0 0.0
    %243 = vmatpush1.xpose.msra.mxu0 0.0
    %244 = vmatprep.subr.mxu0 0.0
    %245 = vmatpush1.xpose.msra.mxu0 0.0
    %246 = vmatprep.subr.mxu0 0.0
    %247 = vmatpush1.xpose.msra.mxu0 0.0
    %248 = vmatprep.subr.mxu0 0.0
    %249 = vmatpush1.xpose.msra.mxu0 0.0
    %250 = vmatprep.subr.mxu0 0.0
    %251 = vmatpush1.xpose.msra.mxu0 0.0
    %252 = vmatprep.subr.mxu0 0.0
    %253 = vmatpush1.xpose.msra.mxu0 0.0
    %254 = vmatprep.subr.mxu0 0.0
    %255 = vmatpush1.xpose.msra.mxu0 0.0
    %256 = vmatprep.subr.mxu0 0.0
    %257 = vmatpush1.xpose.msra.mxu0 0.0
    %258 = vmatprep.subr.mxu0 0.0
    %259 = vmatpush1.xpose.msra.mxu0 0.0
    %260 = vmatprep.subr.mxu0 0.0
    %261 = vmatpush1.xpose.msra.mxu0 0.0
    %262 = vmatprep.mubr.f32.mxu0 0.0
    %263 = vmatmul.mubr.f32.gmra.mrb[0].mxu0 %v166
    %v264 = vpop.f32.mrb[0].mxu0
    %v265 = vadd.f32 %v141, %v264
    %v266 = vpop.f32.mrb[0].mxu0
    %267 = vmatprep.mubr.f32.mxu0 0.0
    %268 = vmatmul.mubr.f32.gmra.mrb[0].mxu0 %v168
    %v269 = vpop.f32.mrb[0].mxu0
    %v270 = vadd.f32 %v142, %v269
    %v271 = vpop.f32.mrb[0].mxu0
    %272 = vmatprep.mubr.f32.mxu0 0.0
    %273 = vmatmul.mubr.f32.gmra.mrb[0].mxu0 %v170
    %v274 = vpop.f32.mrb[0].mxu0
    %v275 = vadd.f32 %v143, %v274
    %v276 = vpop.f32.mrb[0].mxu0
    %277 = vmatprep.mubr.f32.mxu0 0.0
    %278 = vmatmul.mubr.f32.gmra.mrb[0].mxu0 %v172
    %v279 = vpop.f32.mrb[0].mxu0
    %v280 = vadd.f32 %v144, %v279
    %v281 = vpop.f32.mrb[0].mxu0
    %282 = vmatprep.mubr.f32.mxu0 0.0
    %283 = vmatmul.mubr.f32.gmra.mrb[0].mxu0 %v174
    %v284 = vpop.f32.mrb[0].mxu0
    %v285 = vadd.f32 %v145, %v284
    %v286 = vpop.f32.mrb[0].mxu0
    %287 = vmatprep.mubr.f32.mxu0 0.0
    %288 = vmatmul.mubr.f32.gmra.mrb[0].mxu0 %v176
    %v289 = vpop.f32.mrb[0].mxu0
    %v290 = vadd.f32 %v146, %v289
    %v291 = vpop.f32.mrb[0].mxu0
    %292 = vmatprep.mubr.f32.mxu0 0.0
    %293 = vmatmul.mubr.f32.gmra.mrb[0].mxu0 %v178
    %v294 = vpop.f32.mrb[0].mxu0
    %v295 = vadd.f32 %v147, %v294
    %v296 = vpop.f32.mrb[0].mxu0
    %297 = vmatprep.mubr.f32.mxu0 0.0
    %298 = vmatmul.mubr.f32.gmra.mrb[0].mxu0 %v180
    %v299 = vpop.f32.mrb[0].mxu0
    %v300 = vadd.f32 %v148, %v299
    %v301 = vpop.f32.mrb[0].mxu0
    %302 = vdwg.mxu0
    %vm303 = vcmask 523264
    %v304 = vsel %vm303, %v265, -inf
    %305 = vmax.xlane.f32.xlu0 %v304
    %v306 = vpop.xlane.xlu0 %305
    %v307 = vsel %vm303, %v270, -inf
    %308 = vmax.xlane.f32.xlu0 %v307
    %v309 = vpop.xlane.xlu0 %308
    %v310 = vsel %vm303, %v275, -inf
    %311 = vmax.xlane.f32.xlu0 %v310
    %v312 = vpop.xlane.xlu0 %311
    %v313 = vsel %vm303, %v280, -inf
    %314 = vmax.xlane.f32.xlu0 %v313
    %v315 = vpop.xlane.xlu0 %314
    %v316 = vsel %vm303, %v285, -inf
    %317 = vmax.xlane.f32.xlu0 %v316
    %v318 = vpop.xlane.xlu0 %317
    %v319 = vsel %vm303, %v290, -inf
    %320 = vmax.xlane.f32.xlu0 %v319
    %v321 = vpop.xlane.xlu0 %320
    %v322 = vsel %vm303, %v295, -inf
    %323 = vmax.xlane.f32.xlu0 %v322
    %v324 = vpop.xlane.xlu0 %323
    %v325 = vsel %vm303, %v300, -inf
    %326 = vmax.xlane.f32.xlu0 %v325
    %v327 = vpop.xlane.xlu0 %326
    %v328 = vsub.f32 %v265, %v306
    %v329 = vsub.f32 %v270, %v309
    %v330 = vsub.f32 %v275, %v312
    %v331 = vsub.f32 %v280, %v315
    %v332 = vsub.f32 %v285, %v318
    %v333 = vsub.f32 %v290, %v321
    %v334 = vsub.f32 %v295, %v324
    %v335 = vsub.f32 %v300, %v327
    %v336 = vmul.f32 %v328, 1.442695
    %v337 = vpow.pop %v336
    %v338 = vmul.f32 %v329, 1.442695
    %v339 = vpow.pop %v338
    %v340 = vmul.f32 %v330, 1.442695
    %v341 = vpow.pop %v340
    %v342 = vmul.f32 %v331, 1.442695
    %v343 = vpow.pop %v342
    %v344 = vmul.f32 %v332, 1.442695
    %v345 = vpow.pop %v344
    %v346 = vmul.f32 %v333, 1.442695
    %v347 = vpow.pop %v346
    %v348 = vmul.f32 %v334, 1.442695
    %v349 = vpow.pop %v348
    %v350 = vmul.f32 %v335, 1.442695
    %v351 = vpow.pop %v350
    %v352 = vsel %vm303, %v337, 0.0
    %353 = vadd.xlane.f32.xlu0 %v352
    %v354 = vpop.xlane.xlu0 %353
    %v355 = vsel %vm303, %v339, 0.0
    %356 = vadd.xlane.f32.xlu0 %v355
    %v357 = vpop.xlane.xlu0 %356
    %v358 = vsel %vm303, %v341, 0.0
    %359 = vadd.xlane.f32.xlu0 %v358
    %v360 = vpop.xlane.xlu0 %359
    %v361 = vsel %vm303, %v343, 0.0
    %362 = vadd.xlane.f32.xlu0 %v361
    %v363 = vpop.xlane.xlu0 %362
    %v364 = vsel %vm303, %v345, 0.0
    %365 = vadd.xlane.f32.xlu0 %v364
    %v366 = vpop.xlane.xlu0 %365
    %v367 = vsel %vm303, %v347, 0.0
    %368 = vadd.xlane.f32.xlu0 %v367
    %v369 = vpop.xlane.xlu0 %368
    %v370 = vsel %vm303, %v349, 0.0
    %371 = vadd.xlane.f32.xlu0 %v370
    %v372 = vpop.xlane.xlu0 %371
    %v373 = vsel %vm303, %v351, 0.0
    %374 = vadd.xlane.f32.xlu0 %v373
    %v375 = vpop.xlane.xlu0 %374
    %376 = vrot.lane.b32.xlu0 %v119, 64
    %v377 = vpop.permute.xlu0 %376
    %378 = vrot.lane.b32.xlu0 %v124, 64
    %v379 = vpop.permute.xlu0 %378
    %380 = vrot.lane.b32.xlu0 %v130, 64
    %v381 = vpop.permute.xlu0 %380
    %382 = vrot.lane.b32.xlu0 %v132, 64
    %v383 = vpop.permute.xlu0 %382
    %384 = vrot.lane.b32.xlu0 %v134, 64
    %v385 = vpop.permute.xlu0 %384
    %386 = vrot.lane.b32.xlu0 %v136, 64
    %v387 = vpop.permute.xlu0 %386
    %388 = vrot.lane.b32.xlu0 %v138, 64
    %v389 = vpop.permute.xlu0 %388
    %390 = vrot.lane.b32.xlu0 %v140, 64
    %v391 = vpop.permute.xlu0 %390
    %v401 = vsel %vm303, %v337, 0
    %v404 = vsel %vm303, %v339, 0
    %v407 = vsel %vm303, %v341, 0
    %v410 = vsel %vm303, %v343, 0
    %v413 = vsel %vm303, %v345, 0
    %v416 = vsel %vm303, %v347, 0
    %v419 = vsel %vm303, %v349, 0
    %v422 = vsel %vm303, %v351, 0
    %424 = vmatprep.subr.mxu0 0.0
    %425 = vmatpush1.msra.mxu0 %v377
    %426 = vmatprep.subr.mxu0 0.0
    %427 = vmatpush1.msra.mxu0 %v379
    %428 = vmatprep.subr.mxu0 0.0
    %429 = vmatpush1.msra.mxu0 %v381
    %430 = vmatprep.subr.mxu0 0.0
    %431 = vmatpush1.msra.mxu0 %v383
    %432 = vmatprep.subr.mxu0 0.0
    %433 = vmatpush1.msra.mxu0 %v385
    %434 = vmatprep.subr.mxu0 0.0
    %435 = vmatpush1.msra.mxu0 %v387
    %436 = vmatprep.subr.mxu0 0.0
    %437 = vmatpush1.msra.mxu0 %v389
    %438 = vmatprep.subr.mxu0 0.0
    %439 = vmatpush1.msra.mxu0 %v391
    %440 = vmatprep.subr.mxu0 0.0
    %441 = vmatpush1.msra.mxu0 0.0
    %442 = vmatprep.subr.mxu0 0.0
    %443 = vmatpush1.msra.mxu0 0.0
    %444 = vmatprep.subr.mxu0 0.0
    %445 = vmatpush1.msra.mxu0 0.0
    %446 = vmatprep.subr.mxu0 0.0
    %447 = vmatpush1.msra.mxu0 0.0
    %448 = vmatprep.subr.mxu0 0.0
    %449 = vmatpush1.msra.mxu0 0.0
    %450 = vmatprep.subr.mxu0 0.0
    %451 = vmatpush1.msra.mxu0 0.0
    %452 = vmatprep.subr.mxu0 0.0
    %453 = vmatpush1.msra.mxu0 0.0
    %454 = vmatprep.subr.mxu0 0.0
    %455 = vmatpush1.msra.mxu0 0.0
    %456 = vmatprep.subr.mxu0 0.0
    %457 = vmatpush1.msra.mxu0 0.0
    %458 = vmatprep.subr.mxu0 0.0
    %459 = vmatpush1.msra.mxu0 0.0
    %460 = vmatprep.subr.mxu0 0.0
    %461 = vmatpush1.msra.mxu0 0.0
    %462 = vmatprep.subr.mxu0 0.0
    %463 = vmatpush1.msra.mxu0 0.0
    %464 = vmatprep.subr.mxu0 0.0
    %465 = vmatpush1.msra.mxu0 0.0
    %466 = vmatprep.subr.mxu0 0.0
    %467 = vmatpush1.msra.mxu0 0.0
    %468 = vmatprep.subr.mxu0 0.0
    %469 = vmatpush1.msra.mxu0 0.0
    %470 = vmatprep.subr.mxu0 0.0
    %471 = vmatpush1.msra.mxu0 0.0
    %472 = vmatprep.subr.mxu0 0.0
    %473 = vmatpush1.msra.mxu0 0.0
    %474 = vmatprep.subr.mxu0 0.0
    %475 = vmatpush1.msra.mxu0 0.0
    %476 = vmatprep.subr.mxu0 0.0
    %477 = vmatpush1.msra.mxu0 0.0
    %478 = vmatprep.subr.mxu0 0.0
    %479 = vmatpush1.msra.mxu0 0.0
    %480 = vmatprep.subr.mxu0 0.0
    %481 = vmatpush1.msra.mxu0 0.0
    %482 = vmatprep.subr.mxu0 0.0
    %483 = vmatpush1.msra.mxu0 0.0
    %484 = vmatprep.subr.mxu0 0.0
    %485 = vmatpush1.msra.mxu0 0.0
    %486 = vmatprep.subr.mxu0 0.0
    %487 = vmatpush1.msra.mxu0 0.0
    %488 = vmatprep.mubr.f32.mxu0 0.0
    %489 = vmatmul.mubr.f32.gmra.mrb[0].mxu0 %v401
    %v490 = vpop.f32.mrb[0].mxu0
    %v491 = vadd.f32 0.0, %v490
    %v492 = vpop.f32.mrb[0].mxu0
    %493 = vmatprep.mubr.f32.mxu0 0.0
    %494 = vmatmul.mubr.f32.gmra.mrb[0].mxu0 %v404
    %v495 = vpop.f32.mrb[0].mxu0
    %v496 = vadd.f32 0.0, %v495
    %v497 = vpop.f32.mrb[0].mxu0
    %498 = vmatprep.mubr.f32.mxu0 0.0
    %499 = vmatmul.mubr.f32.gmra.mrb[0].mxu0 %v407
    %v500 = vpop.f32.mrb[0].mxu0
    %v501 = vadd.f32 0.0, %v500
    %v502 = vpop.f32.mrb[0].mxu0
    %503 = vmatprep.mubr.f32.mxu0 0.0
    %504 = vmatmul.mubr.f32.gmra.mrb[0].mxu0 %v410
    %v505 = vpop.f32.mrb[0].mxu0
    %v506 = vadd.f32 0.0, %v505
    %v507 = vpop.f32.mrb[0].mxu0
    %508 = vmatprep.mubr.f32.mxu0 0.0
    %509 = vmatmul.mubr.f32.gmra.mrb[0].mxu0 %v413
    %v510 = vpop.f32.mrb[0].mxu0
    %v511 = vadd.f32 0.0, %v510
    %v512 = vpop.f32.mrb[0].mxu0
    %513 = vmatprep.mubr.f32.mxu0 0.0
    %514 = vmatmul.mubr.f32.gmra.mrb[0].mxu0 %v416
    %v515 = vpop.f32.mrb[0].mxu0
    %v516 = vadd.f32 0.0, %v515
    %v517 = vpop.f32.mrb[0].mxu0
    %518 = vmatprep.mubr.f32.mxu0 0.0
    %519 = vmatmul.mubr.f32.gmra.mrb[0].mxu0 %v419
    %v520 = vpop.f32.mrb[0].mxu0
    %v521 = vadd.f32 0.0, %v520
    %v522 = vpop.f32.mrb[0].mxu0
    %523 = vmatprep.mubr.f32.mxu0 0.0
    %524 = vmatmul.mubr.f32.gmra.mrb[0].mxu0 %v422
    %v525 = vpop.f32.mrb[0].mxu0
    %v526 = vadd.f32 0.0, %v525
    %v527 = vpop.f32.mrb[0].mxu0
    %528 = vdwg.mxu0
    %v529 = vrcp.pop %v354
    %v530 = vrcp.pop %v357
    %v531 = vrcp.pop %v360
    %v532 = vrcp.pop %v363
    %v533 = vrcp.pop %v366
    %v534 = vrcp.pop %v369
    %v535 = vrcp.pop %v372
    %v536 = vrcp.pop %v375
    %v537 = vmul.f32 %v491, %v529
    %v538 = vmul.f32 %v496, %v530
    %v539 = vmul.f32 %v501, %v531
    %v540 = vmul.f32 %v506, %v532
    %v541 = vmul.f32 %v511, %v533
    %v542 = vmul.f32 %v516, %v534
    %v543 = vmul.f32 %v521, %v535
    %v544 = vmul.f32 %v526, %v536
    %547 = vrot.lane.b32.xlu0 %v539, 8
    %v548 = vpop.permute.xlu0 %547
    %549 = vrot.lane.b32.xlu0 %v540, 8
    %v550 = vpop.permute.xlu0 %549
    %555 = vrot.lane.b32.xlu0 %v541, 16
    %v556 = vpop.permute.xlu0 %555
    %557 = vrot.lane.b32.xlu0 %v542, 16
    %v558 = vpop.permute.xlu0 %557
    %563 = vrot.lane.b32.xlu0 %v543, 24
    %v564 = vpop.permute.xlu0 %563
    %565 = vrot.lane.b32.xlu0 %v544, 24
    %v566 = vpop.permute.xlu0 %565
    %v569 = vsel %vm165, %v537, %v548
    %v570 = vsel %vm165, %v538, %v550
    %vm571 = vcmask 130048
    %v572 = vsel %vm571, %v569, %v556
    %v573 = vsel %vm571, %v570, %v558
    %vm574 = vcmask 195584
    %v575 = vsel %vm574, %v572, %v564
    %v576 = vsel %vm574, %v573, %v566
    %v577 = vlaneseq
    %v578 = vshrl.u32 %v577, 7
    %v579 = vsub.s32 0, %v578
    %v580 = vrot.slane %v26, %v579
    %v582 = vsel %vm45, %v575, 0
    %v585 = vsel %vm45, %v576, 0
    %587 = vmatprep.subr.mxu0 0.0
    %588 = vmatpush1.msra.mxu0 %v22
    %589 = vmatprep.subr.mxu0 0.0
    %590 = vmatpush1.msra.mxu0 %v23
    %591 = vmatprep.subr.mxu0 0.0
    %592 = vmatpush1.msra.mxu0 %v24
    %593 = vmatprep.subr.mxu0 0.0
    %594 = vmatpush1.msra.mxu0 %v25
    %595 = vmatprep.subr.mxu0 0.0
    %596 = vmatpush1.msra.mxu0 0.0
    %597 = vmatprep.subr.mxu0 0.0
    %598 = vmatpush1.msra.mxu0 0.0
    %599 = vmatprep.subr.mxu0 0.0
    %600 = vmatpush1.msra.mxu0 0.0
    %601 = vmatprep.subr.mxu0 0.0
    %602 = vmatpush1.msra.mxu0 0.0
    %603 = vmatprep.subr.mxu0 0.0
    %604 = vmatpush1.msra.mxu0 0.0
    %605 = vmatprep.subr.mxu0 0.0
    %606 = vmatpush1.msra.mxu0 0.0
    %607 = vmatprep.subr.mxu0 0.0
    %608 = vmatpush1.msra.mxu0 0.0
    %609 = vmatprep.subr.mxu0 0.0
    %610 = vmatpush1.msra.mxu0 0.0
    %611 = vmatprep.subr.mxu0 0.0
    %612 = vmatpush1.msra.mxu0 0.0
    %613 = vmatprep.subr.mxu0 0.0
    %614 = vmatpush1.msra.mxu0 0.0
    %615 = vmatprep.subr.mxu0 0.0
    %616 = vmatpush1.msra.mxu0 0.0
    %617 = vmatprep.subr.mxu0 0.0
    %618 = vmatpush1.msra.mxu0 0.0
    %619 = vmatprep.subr.mxu0 0.0
    %620 = vmatpush1.msra.mxu0 0.0
    %621 = vmatprep.subr.mxu0 0.0
    %622 = vmatpush1.msra.mxu0 0.0
    %623 = vmatprep.subr.mxu0 0.0
    %624 = vmatpush1.msra.mxu0 0.0
    %625 = vmatprep.subr.mxu0 0.0
    %626 = vmatpush1.msra.mxu0 0.0
    %627 = vmatprep.subr.mxu0 0.0
    %628 = vmatpush1.msra.mxu0 0.0
    %629 = vmatprep.subr.mxu0 0.0
    %630 = vmatpush1.msra.mxu0 0.0
    %631 = vmatprep.subr.mxu0 0.0
    %632 = vmatpush1.msra.mxu0 0.0
    %633 = vmatprep.subr.mxu0 0.0
    %634 = vmatpush1.msra.mxu0 0.0
    %635 = vmatprep.subr.mxu0 0.0
    %636 = vmatpush1.msra.mxu0 0.0
    %637 = vmatprep.subr.mxu0 0.0
    %638 = vmatpush1.msra.mxu0 0.0
    %639 = vmatprep.subr.mxu0 0.0
    %640 = vmatpush1.msra.mxu0 0.0
    %641 = vmatprep.subr.mxu0 0.0
    %642 = vmatpush1.msra.mxu0 0.0
    %643 = vmatprep.subr.mxu0 0.0
    %644 = vmatpush1.msra.mxu0 0.0
    %645 = vmatprep.subr.mxu0 0.0
    %646 = vmatpush1.msra.mxu0 0.0
    %647 = vmatprep.subr.mxu0 0.0
    %648 = vmatpush1.msra.mxu0 0.0
    %649 = vmatprep.subr.mxu0 0.0
    %650 = vmatpush1.msra.mxu0 0.0
    %651 = vmatprep.mubr.f32.mxu0 0.0
    %652 = vmatmul.mubr.f32.gmra.mrb[0].mxu0 %v582
    %v653 = vpop.f32.mrb[0].mxu0
    %v654 = vadd.f32 %v580, %v653
    %v655 = vpop.f32.mrb[0].mxu0
    %656 = vmatprep.mubr.f32.mxu0 0.0
    %657 = vmatmul.mubr.f32.gmra.mrb[0].mxu0 %v585
    %v658 = vpop.f32.mrb[0].mxu0
    %v659 = vadd.f32 %v580, %v658
    %v660 = vpop.f32.mrb[0].mxu0
    %661 = vdwg.mxu0
    %v662 = vadd.f32 %v15, %v654
    %v663 = vadd.f32 %v16, %v659
    %v664 = vlaneseq
    %v665 = vshrl.u32 %v664, 7
    %v666 = vsub.s32 0, %v665
    %v667 = vrot.slane %v31, %v666
    %v669 = vsel %vm45, %v662, 0
    %v672 = vsel %vm45, %v663, 0
    %674 = vmatprep.subr.mxu0 0.0
    %675 = vmatpush1.msra.mxu0 %v27
    %676 = vmatprep.subr.mxu0 0.0
    %677 = vmatpush1.msra.mxu0 %v28
    %678 = vmatprep.subr.mxu0 0.0
    %679 = vmatpush1.msra.mxu0 %v29
    %680 = vmatprep.subr.mxu0 0.0
    %681 = vmatpush1.msra.mxu0 %v30
    %682 = vmatprep.subr.mxu0 0.0
    %683 = vmatpush1.msra.mxu0 0.0
    %684 = vmatprep.subr.mxu0 0.0
    %685 = vmatpush1.msra.mxu0 0.0
    %686 = vmatprep.subr.mxu0 0.0
    %687 = vmatpush1.msra.mxu0 0.0
    %688 = vmatprep.subr.mxu0 0.0
    %689 = vmatpush1.msra.mxu0 0.0
    %690 = vmatprep.subr.mxu0 0.0
    %691 = vmatpush1.msra.mxu0 0.0
    %692 = vmatprep.subr.mxu0 0.0
    %693 = vmatpush1.msra.mxu0 0.0
    %694 = vmatprep.subr.mxu0 0.0
    %695 = vmatpush1.msra.mxu0 0.0
    %696 = vmatprep.subr.mxu0 0.0
    %697 = vmatpush1.msra.mxu0 0.0
    %698 = vmatprep.subr.mxu0 0.0
    %699 = vmatpush1.msra.mxu0 0.0
    %700 = vmatprep.subr.mxu0 0.0
    %701 = vmatpush1.msra.mxu0 0.0
    %702 = vmatprep.subr.mxu0 0.0
    %703 = vmatpush1.msra.mxu0 0.0
    %704 = vmatprep.subr.mxu0 0.0
    %705 = vmatpush1.msra.mxu0 0.0
    %706 = vmatprep.subr.mxu0 0.0
    %707 = vmatpush1.msra.mxu0 0.0
    %708 = vmatprep.subr.mxu0 0.0
    %709 = vmatpush1.msra.mxu0 0.0
    %710 = vmatprep.subr.mxu0 0.0
    %711 = vmatpush1.msra.mxu0 0.0
    %712 = vmatprep.subr.mxu0 0.0
    %713 = vmatpush1.msra.mxu0 0.0
    %714 = vmatprep.subr.mxu0 0.0
    %715 = vmatpush1.msra.mxu0 0.0
    %716 = vmatprep.subr.mxu0 0.0
    %717 = vmatpush1.msra.mxu0 0.0
    %718 = vmatprep.subr.mxu0 0.0
    %719 = vmatpush1.msra.mxu0 0.0
    %720 = vmatprep.subr.mxu0 0.0
    %721 = vmatpush1.msra.mxu0 0.0
    %722 = vmatprep.subr.mxu0 0.0
    %723 = vmatpush1.msra.mxu0 0.0
    %724 = vmatprep.subr.mxu0 0.0
    %725 = vmatpush1.msra.mxu0 0.0
    %726 = vmatprep.subr.mxu0 0.0
    %727 = vmatpush1.msra.mxu0 0.0
    %728 = vmatprep.subr.mxu0 0.0
    %729 = vmatpush1.msra.mxu0 0.0
    %730 = vmatprep.subr.mxu0 0.0
    %731 = vmatpush1.msra.mxu0 0.0
    %732 = vmatprep.subr.mxu0 0.0
    %733 = vmatpush1.msra.mxu0 0.0
    %734 = vmatprep.subr.mxu0 0.0
    %735 = vmatpush1.msra.mxu0 0.0
    %736 = vmatprep.subr.mxu0 0.0
    %737 = vmatpush1.msra.mxu0 0.0
    %738 = vmatprep.mubr.f32.mxu0 0.0
    %739 = vmatmul.mubr.f32.gmra.mrb[0].mxu0 %v669
    %v740 = vpop.f32.mrb[0].mxu0
    %v741 = vadd.f32 %v667, %v740
    %v742 = vpop.f32.mrb[0].mxu0
    %743 = vmatprep.mubr.f32.mxu0 0.0
    %744 = vmatmul.mubr.f32.gmra.mrb[0].mxu0 %v672
    %v745 = vpop.f32.mrb[0].mxu0
    %v746 = vadd.f32 %v667, %v745
    %v747 = vpop.f32.mrb[0].mxu0
    %748 = vdwg.mxu0
    %v749 = vmax.f32 %v741, 0.0
    %v750 = vmax.f32 %v746, 0.0
    %v751 = vlaneseq
    %v752 = vshrl.u32 %v751, 7
    %v753 = vsub.s32 0, %v752
    %v754 = vrot.slane %v40, %v753
    %v756 = vsel %vm303, %v749, 0
    %v759 = vsel %vm303, %v750, 0
    %761 = vmatprep.subr.mxu0 0.0
    %762 = vmatpush1.msra.mxu0 %v32
    %763 = vmatprep.subr.mxu0 0.0
    %764 = vmatpush1.msra.mxu0 %v33
    %765 = vmatprep.subr.mxu0 0.0
    %766 = vmatpush1.msra.mxu0 %v34
    %767 = vmatprep.subr.mxu0 0.0
    %768 = vmatpush1.msra.mxu0 %v35
    %769 = vmatprep.subr.mxu0 0.0
    %770 = vmatpush1.msra.mxu0 %v36
    %771 = vmatprep.subr.mxu0 0.0
    %772 = vmatpush1.msra.mxu0 %v37
    %773 = vmatprep.subr.mxu0 0.0
    %774 = vmatpush1.msra.mxu0 %v38
    %775 = vmatprep.subr.mxu0 0.0
    %776 = vmatpush1.msra.mxu0 %v39
    %777 = vmatprep.subr.mxu0 0.0
    %778 = vmatpush1.msra.mxu0 0.0
    %779 = vmatprep.subr.mxu0 0.0
    %780 = vmatpush1.msra.mxu0 0.0
    %781 = vmatprep.subr.mxu0 0.0
    %782 = vmatpush1.msra.mxu0 0.0
    %783 = vmatprep.subr.mxu0 0.0
    %784 = vmatpush1.msra.mxu0 0.0
    %785 = vmatprep.subr.mxu0 0.0
    %786 = vmatpush1.msra.mxu0 0.0
    %787 = vmatprep.subr.mxu0 0.0
    %788 = vmatpush1.msra.mxu0 0.0
    %789 = vmatprep.subr.mxu0 0.0
    %790 = vmatpush1.msra.mxu0 0.0
    %791 = vmatprep.subr.mxu0 0.0
    %792 = vmatpush1.msra.mxu0 0.0
    %793 = vmatprep.subr.mxu0 0.0
    %794 = vmatpush1.msra.mxu0 0.0
    %795 = vmatprep.subr.mxu0 0.0
    %796 = vmatpush1.msra.mxu0 0.0
    %797 = vmatprep.subr.mxu0 0.0
    %798 = vmatpush1.msra.mxu0 0.0
    %799 = vmatprep.subr.mxu0 0.0
    %800 = vmatpush1.msra.mxu0 0.0
    %801 = vmatprep.subr.mxu0 0.0
    %802 = vmatpush1.msra.mxu0 0.0
    %803 = vmatprep.subr.mxu0 0.0
    %804 = vmatpush1.msra.mxu0 0.0
    %805 = vmatprep.subr.mxu0 0.0
    %806 = vmatpush1.msra.mxu0 0.0
    %807 = vmatprep.subr.mxu0 0.0
    %808 = vmatpush1.msra.mxu0 0.0
    %809 = vmatprep.subr.mxu0 0.0
    %810 = vmatpush1.msra.mxu0 0.0
    %811 = vmatprep.subr.mxu0 0.0
    %812 = vmatpush1.msra.mxu0 0.0
    %813 = vmatprep.subr.mxu0 0.0
    %814 = vmatpush1.msra.mxu0 0.0
    %815 = vmatprep.subr.mxu0 0.0
    %816 = vmatpush1.msra.mxu0 0.0
    %817 = vmatprep.subr.mxu0 0.0
    %818 = vmatpush1.msra.mxu0 0.0
    %819 = vmatprep.subr.mxu0 0.0
    %820 = vmatpush1.msra.mxu0 0.0
    %821 = vmatprep.subr.mxu0 0.0
    %822 = vmatpush1.msra.mxu0 0.0
    %823 = vmatprep.subr.mxu0 0.0
    %824 = vmatpush1.msra.mxu0 0.0
    %825 = vmatprep.mubr.f32.mxu0 0.0
    %826 = vmatmul.mubr.f32.gmra.mrb[0].mxu0 %v756
    %v827 = vpop.f32.mrb[0].mxu0
    %v828 = vadd.f32 %v754, %v827
    %v829 = vpop.f32.mrb[0].mxu0
    %830 = vmatprep.mubr.f32.mxu0 0.0
    %831 = vmatmul.mubr.f32.gmra.mrb[0].mxu0 %v759
    %v832 = vpop.f32.mrb[0].mxu0
    %v833 = vadd.f32 %v754, %v832
    %v834 = vpop.f32.mrb[0].mxu0
    %835 = vdwg.mxu0
    %v836 = vadd.f32 %v662, %v828
    %v837 = vadd.f32 %v663, %v833
    %838 = vst.msk [vmem:[#allocation2] sm:$0xff] %vm45, %v836
    %839 = vst.msk [vmem:[#allocation2 + $0x8] sm:$0xff] %vm45, %v837
    // Predicated region
    $region14: #{rezero_forward.1} parent=1 // pred_check
      _
    $region15: #{rezero_forward.1} parent=1 // pred_check_branch
      %841 = sbr.rel (0) target = $region17
    $region16: #{rezero_forward.1} parent=1 // pred_region
      %s843 = ssub.s32 256, 256
      %844 = vsyncadd [#allocation3], %s843
      %s845 = sshll.u32 [#allocation2], 4
      %s846 = int_to_ptr.vmem [resolvable:$true] %s845
      %851 = dma.vmem_to_hbm [thread:$0]  %s846, 256, %s3, [#allocation3], 128, 128, 8
    $region17: #{rezero_forward.1} parent=1 // pred_fallthru
      _
    // Predicated region
    $region18: #{rezero_forward.1} parent=1 // pred_check
      _
    $region19: #{rezero_forward.1} parent=1 // pred_check_branch
      %853 = sbr.rel (0) target = $region21
    $region20: #{rezero_forward.1} parent=1 // pred_region
      %854 = dma.done [#allocation3], 256
    $region21: #{rezero_forward.1} parent=1 // pred_fallthru
      _
    %855 = vsyncpa [#allocation3], 1

</llo_original>
